<compile_context>
chip_gen: v7x
topology: tpu7x:2x2x1
jax: 0.10.0
libtpu: 0.0.40
codegen_flags: <defaults>
</compile_context>

<pallas_src>
import jax
import jax.numpy as jnp
from jax.experimental import pallas as pl
from jax.experimental.pallas import tpu as pltpu

LN_EPS = 1e-5

_VEC_NAMES = ("bv", "gv", "betav", "bl", "gl", "betal", "bf1", "gf", "betaf", "bf2")


def _round_up(x, m):
    return (x + m - 1) // m * m


def text_reconstructor_kernel(vis_ref, lay_ref, wv_ref, wl_ref, wf1v_ref, wf1l_ref,
                              wf2_ref, seg_ref, vecs_ref, out_ref):
    """One row tile; every array is token-packed (`pack` tokens per 128-lane row)."""
    vecs = vecs_ref[...]                      # (10, Dp) f32, resident bias/LN slab
    bv, gv, betav = vecs[0:1], vecs[1:2], vecs[2:3]
    bl, gl, betal = vecs[3:4], vecs[4:5], vecs[5:6]
    bf1, gf, betaf = vecs[6:7], vecs[7:8], vecs[8:9]
    bf2 = vecs[9:10]
    seg = seg_ref[...]                        # (Dp, Dp) bf16 segmented-mean operator

    def seg_ln_relu(x, gamma, beta):
        # Per-token LayerNorm on packed rows: segmented mean / centered second moment via
        # MXU matmuls against `seg` (broadcasts each token-group mean back to its lanes);
        # all centering / variance / rsqrt math stays f32.
        mean = jnp.dot(x.astype(jnp.bfloat16), seg, preferred_element_type=jnp.float32)
        xc = x - mean
        var = jnp.dot((xc * xc).astype(jnp.bfloat16), seg,
                      preferred_element_type=jnp.float32)
        return jnp.maximum(xc * jax.lax.rsqrt(var + LN_EPS) * gamma + beta, 0.0)

    # --- visual encoder: Linear -> LayerNorm -> ReLU -> Dropout(identity, eval) ---
    vt = jnp.dot(vis_ref[...].astype(jnp.bfloat16), wv_ref[...],
                 preferred_element_type=jnp.float32) + bv
    vt = seg_ln_relu(vt, gv, betav)

    # --- layout encoder: Linear -> LayerNorm -> ReLU -> Dropout(identity, eval) ---
    lt = jnp.dot(lay_ref[...].astype(jnp.bfloat16), wl_ref[...],
                 preferred_element_type=jnp.float32) + bl
    lt = seg_ln_relu(lt, gl, betal)

    # --- fusion Linear(2*Dt -> Dt) without a lane concat: cat([vt,lt]) @ Wf1 ---
    h = (jnp.dot(vt.astype(jnp.bfloat16), wf1v_ref[...], preferred_element_type=jnp.float32)
         + jnp.dot(lt.astype(jnp.bfloat16), wf1l_ref[...], preferred_element_type=jnp.float32)
         + bf1)
    h = seg_ln_relu(h, gf, betaf)

    # --- final Linear(Dt -> Dt); lane-dense (Dp = pack*Dt) unmasked store ---
    out_ref[...] = jnp.dot(h.astype(jnp.bfloat16), wf2_ref[...],
                           preferred_element_type=jnp.float32) + bf2


def text_reconstructor_forward(visual, layout, params, *, tile_rows=2048):
    """visual: [B, S, Dv], layout: [B, S, Dl] -> reconstructed text [B, S, Dt] (f32)."""
    B, S, Dv = visual.shape
    _, _, Dl = layout.shape
    Dt = params["wv"].shape[1]
    N = B * S
    f32 = jnp.float32

    # Token packing: `pack` consecutive tokens per 128-lane row (free reshapes).
    pack = 128 // Dt if (Dt <= 128 and 128 % Dt == 0) else 1
    Np = pl.cdiv(N, pack)                # packed rows
    n_tok = Np * pack                    # tokens after (< pack rows of) padding
    Dp = pack * Dt                       # packed lane width (=128 when Dt | 128)

    vis2d = visual.reshape(N, Dv).astype(f32)
    lay2d = layout.reshape(N, Dl).astype(f32)
    if n_tok != N:
        # Only when (B*S) % pack != 0: pad < pack token rows so packing reshape is legal.
        vis2d = jnp.pad(vis2d, ((0, n_tok - N), (0, 0)))
        lay2d = jnp.pad(lay2d, ((0, n_tok - N), (0, 0)))
    visp = vis2d.reshape(Np, pack * Dv)          # bitcast-style reshape: no HBM pass
    layp = lay2d.reshape(Np, pack * Dl)

    # Tile over packed rows: big default (amortize per-step overhead), multiple of 8
    # (f32 sublanes); keep >= 2 grid steps when possible so the "parallel" axis can
    # shard across both v7x TensorCores.  Ragged last block is masked by Pallas.
    if Np <= 8:
        tile_p = Np                               # single full-extent block
    else:
        tile_p = min(_round_up(max(tile_rows // pack, 8), 8), _round_up(Np, 8))
        tile_p = max(8, min(tile_p, _round_up(pl.cdiv(Np, 2), 8)))
    grid = (pl.cdiv(Np, tile_p),)

    # Resident weights: block-diagonal (kron) versions act on packed rows; bf16 MXU
    # operands, f32 accumulation in-kernel.  Fusion weight is split so the kernel never
    # lane-concatenates [vt, lt].
    eye = jnp.eye(pack, dtype=f32)
    blk = lambda w: jnp.kron(eye, w.astype(f32)).astype(jnp.bfloat16)
    wv_b = blk(params["wv"])
    wl_b = blk(params["wl"])
    wf1v_b = blk(params["wf1"][:Dt])
    wf1l_b = blk(params["wf1"][Dt:])
    wf2_b = blk(params["wf2"])
    # Segmented-mean operator: x @ seg broadcasts each token's channel mean back to its
    # own Dt-lane group (block-constant 1/Dt matrix) -> LN reduction rides the MXU.
    seg = jnp.kron(eye, jnp.full((Dt, Dt), 1.0 / Dt, f32)).astype(jnp.bfloat16)
    # Bias / LayerNorm vectors tiled per packed token group, shipped as one (10, Dp) slab.
    vecs = jnp.stack([jnp.tile(params[name].astype(f32), pack) for name in _VEC_NAMES])

    # Advisory cost estimate (linear layers + 3 segmented-LN stats matmuls + rsqrts).
    weight_bytes = 2 * (pack * (Dv + Dl) * Dp + 4 * Dp * Dp) + 4 * len(_VEC_NAMES) * Dp
    flops_per_tok = 2 * Dt * (Dv + Dl + 2 * Dt + Dt) + 12 * Dt * Dt
    cost = pl.CostEstimate(
        flops=int(n_tok * flops_per_tok),
        transcendentals=int(3 * n_tok * Dt),
        bytes_accessed=int(n_tok * (Dv + Dl + Dt) * 4 + weight_bytes),
    )

    # Scoped-VMEM budget: double-buffered streamed blocks + resident weights + f32
    # intermediates; clamped to a value safe across v5e / v6e / v7x.
    stream_bytes = 2 * tile_p * (pack * (Dv + Dl) + Dp) * 4
    interm_bytes = 8 * tile_p * Dp * 4
    vmem_limit = int(1.5 * (stream_bytes + interm_bytes + 2 * weight_bytes)) + (4 << 20)
    vmem_limit = max(16 << 20, min(vmem_limit, 48 << 20))

    row_spec = lambda d: pl.BlockSpec((tile_p, d), lambda i: (i, 0))
    res_spec = lambda r, c: pl.BlockSpec((r, c), lambda i: (0, 0))

    outp = pl.pallas_call(
        text_reconstructor_kernel,
        out_shape=jax.ShapeDtypeStruct((Np, Dp), f32),
        grid_spec=pltpu.PrefetchScalarGridSpec(
            num_scalar_prefetch=0,
            grid=grid,
            in_specs=[
                row_spec(pack * Dv), row_spec(pack * Dl),      # streamed packed activations
                res_spec(pack * Dv, Dp), res_spec(pack * Dl, Dp),   # encoder weights
                res_spec(Dp, Dp), res_spec(Dp, Dp),            # fusion weight (split)
                res_spec(Dp, Dp),                              # final weight
                res_spec(Dp, Dp),                              # segmented-mean operator
                res_spec(len(_VEC_NAMES), Dp),                 # bias + LN vector slab
            ],
            out_specs=row_spec(Dp),
        ),
        compiler_params=pltpu.CompilerParams(
            dimension_semantics=("parallel",),
            vmem_limit_bytes=vmem_limit,
        ),
        cost_estimate=cost,
    )(visp, layp, wv_b, wl_b, wf1v_b, wf1l_b, wf2_b, seg, vecs)

    out = outp.reshape(n_tok, Dt)                # free reshape back to per-token rows
    if n_tok != N:
        out = out[:N]
    return out.reshape(B, S, Dt)


def init_params(key, visual_dim, layout_dim, text_dim):
    """Deterministic synthetic parameters matching the torch module's shapes."""
    ks = jax.random.split(key, 4)

    def linear(k, din, dout):
        kw, kb = jax.random.split(k)
        scale = 1.0 / jnp.sqrt(din)
        w = jax.random.uniform(kw, (din, dout), jnp.float32, -scale, scale)
        b = jax.random.uniform(kb, (dout,), jnp.float32, -scale, scale)
        return w, b

    wv, bv = linear(ks[0], visual_dim, text_dim)
    wl, bl = linear(ks[1], layout_dim, text_dim)
    wf1, bf1 = linear(ks[2], 2 * text_dim, text_dim)
    wf2, bf2 = linear(ks[3], text_dim, text_dim)

    ones = jnp.ones((text_dim,), jnp.float32)
    zeros = jnp.zeros((text_dim,), jnp.float32)

    return {
        "wv": wv, "bv": bv, "gv": ones, "betav": zeros,
        "wl": wl, "bl": bl, "gl": ones, "betal": zeros,
        "wf1": wf1, "bf1": bf1, "gf": ones, "betaf": zeros,
        "wf2": wf2, "bf2": bf2,
    }


def reference_forward(visual, layout, params):
    """Pure-JAX f32 reference mirroring the torch forward (eval mode)."""
    def ln_relu(x, g, b):
        m = jnp.mean(x, axis=-1, keepdims=True)
        v = jnp.mean((x - m) ** 2, axis=-1, keepdims=True)
        return jnp.maximum((x - m) * jax.lax.rsqrt(v + LN_EPS) * g + b, 0.0)

    vt = ln_relu(visual @ params["wv"] + params["bv"], params["gv"], params["betav"])
    lt = ln_relu(layout @ params["wl"] + params["bl"], params["gl"], params["betal"])
    combined = jnp.concatenate([vt, lt], axis=-1)
    h = ln_relu(combined @ params["wf1"] + params["bf1"], params["gf"], params["betaf"])
    return h @ params["wf2"] + params["bf2"]


if __name__ == "__main__":
    B, S = 2, 8
    visual_dim, layout_dim, text_dim = 48, 24, 32

    key = jax.random.PRNGKey(0)
    k_vis, k_lay, k_par, k_vis2, k_lay2 = jax.random.split(key, 5)

    visual = jax.random.normal(k_vis, (B, S, visual_dim), jnp.float32)
    layout = jax.random.normal(k_lay, (B, S, layout_dim), jnp.float32)
    params = init_params(k_par, visual_dim, layout_dim, text_dim)

    # N = 16 tokens -> 4 packed rows, single full-extent block.
    out = jax.block_until_ready(text_reconstructor_forward(visual, layout, params))
    assert out.shape == (B, S, text_dim)
    ref = reference_forward(visual, layout, params)
    # Kernel uses bf16 MXU operands (same as XLA's default TPU matmul precision) with f32
    # accumulation and f32 LayerNorm math -> small, bounded drift vs the f32 reference.
    assert jnp.allclose(out, ref, atol=2e-2, rtol=2e-2), "mismatch vs f32 reference"

    # Ragged case: N = 111 tokens -> 1 token row of packing pad, 28 packed rows,
    # 2-step grid (tile 16) with a ragged, Pallas-masked last block.
    B2, S2 = 3, 37
    vis2 = jax.random.normal(k_vis2, (B2, S2, visual_dim), jnp.float32)
    lay2 = jax.random.normal(k_lay2, (B2, S2, layout_dim), jnp.float32)
    out2 = jax.block_until_ready(
        text_reconstructor_forward(vis2, lay2, params, tile_rows=64))
    ref2 = reference_forward(vis2, lay2, params)
    assert out2.shape == (B2, S2, text_dim)
    assert jnp.allclose(out2, ref2, atol=2e-2, rtol=2e-2), "mismatch vs f32 reference (ragged)"

    # NOTE: Dropout(0.1) layers are identity in eval mode (reproduced as such).
    print("KERNEL_OK")
</pallas_src>

<mosaic_0001>
module attributes {stable_mosaic.version = 11 : i64} {
  func.func @text_reconstructor_kernel(%arg0: i32, %arg1: memref<4x192xf32, #tpu.memory_space<vmem>>, %arg2: memref<4x96xf32, #tpu.memory_space<vmem>>, %arg3: memref<192x128xbf16, #tpu.memory_space<vmem>>, %arg4: memref<96x128xbf16, #tpu.memory_space<vmem>>, %arg5: memref<128x128xbf16, #tpu.memory_space<vmem>>, %arg6: memref<128x128xbf16, #tpu.memory_space<vmem>>, %arg7: memref<128x128xbf16, #tpu.memory_space<vmem>>, %arg8: memref<128x128xbf16, #tpu.memory_space<vmem>>, %arg9: memref<10x128xf32, #tpu.memory_space<vmem>>, %arg10: memref<4x128xf32, #tpu.memory_space<vmem>>) attributes {dimension_semantics = [#tpu.dimension_semantics<parallel>], iteration_bounds = array<i64: 1>, scalar_prefetch = 0 : i64, scratch_operands = 0 : i64, tpu.core_type = #tpu.core_type<tc>, window_params = [{transform_indices = @transform_0, window_bounds = array<i64: 4, 192>}, {transform_indices = @transform_1, window_bounds = array<i64: 4, 96>}, {pipeline_mode = #tpu.pipeline_mode<synchronous>, transform_indices = @transform_2, window_bounds = array<i64: 192, 128>}, {pipeline_mode = #tpu.pipeline_mode<synchronous>, transform_indices = @transform_3, window_bounds = array<i64: 96, 128>}, {pipeline_mode = #tpu.pipeline_mode<synchronous>, transform_indices = @transform_4, window_bounds = array<i64: 128, 128>}, {pipeline_mode = #tpu.pipeline_mode<synchronous>, transform_indices = @transform_5, window_bounds = array<i64: 128, 128>}, {pipeline_mode = #tpu.pipeline_mode<synchronous>, transform_indices = @transform_6, window_bounds = array<i64: 128, 128>}, {pipeline_mode = #tpu.pipeline_mode<synchronous>, transform_indices = @transform_7, window_bounds = array<i64: 128, 128>}, {pipeline_mode = #tpu.pipeline_mode<synchronous>, transform_indices = @transform_8, window_bounds = array<i64: 10, 128>}, {transform_indices = @transform_9, window_bounds = array<i64: 4, 128>}]} {
    %c0 = arith.constant 0 : index
    %c0_0 = arith.constant 0 : index
    %0 = vector.load %arg9[%c0, %c0_0] : memref<10x128xf32, #tpu.memory_space<vmem>>, vector<10x128xf32>
    %1 = vector.extract_strided_slice %0 {offsets = [0, 0], sizes = [1, 128], strides = [1, 1]} : vector<10x128xf32> to vector<1x128xf32>
    %2 = vector.extract_strided_slice %0 {offsets = [1, 0], sizes = [1, 128], strides = [1, 1]} : vector<10x128xf32> to vector<1x128xf32>
    %3 = vector.extract_strided_slice %0 {offsets = [2, 0], sizes = [1, 128], strides = [1, 1]} : vector<10x128xf32> to vector<1x128xf32>
    %4 = vector.extract_strided_slice %0 {offsets = [3, 0], sizes = [1, 128], strides = [1, 1]} : vector<10x128xf32> to vector<1x128xf32>
    %5 = vector.extract_strided_slice %0 {offsets = [4, 0], sizes = [1, 128], strides = [1, 1]} : vector<10x128xf32> to vector<1x128xf32>
    %6 = vector.extract_strided_slice %0 {offsets = [5, 0], sizes = [1, 128], strides = [1, 1]} : vector<10x128xf32> to vector<1x128xf32>
    %7 = vector.extract_strided_slice %0 {offsets = [6, 0], sizes = [1, 128], strides = [1, 1]} : vector<10x128xf32> to vector<1x128xf32>
    %8 = vector.extract_strided_slice %0 {offsets = [7, 0], sizes = [1, 128], strides = [1, 1]} : vector<10x128xf32> to vector<1x128xf32>
    %9 = vector.extract_strided_slice %0 {offsets = [8, 0], sizes = [1, 128], strides = [1, 1]} : vector<10x128xf32> to vector<1x128xf32>
    %10 = vector.extract_strided_slice %0 {offsets = [9, 0], sizes = [1, 128], strides = [1, 1]} : vector<10x128xf32> to vector<1x128xf32>
    %c0_1 = arith.constant 0 : index
    %c0_2 = arith.constant 0 : index
    %11 = vector.load %arg8[%c0_1, %c0_2] : memref<128x128xbf16, #tpu.memory_space<vmem>>, vector<128x128xbf16>
    %c0_3 = arith.constant 0 : index
    %c0_4 = arith.constant 0 : index
    %12 = vector.load %arg1[%c0_3, %c0_4] : memref<4x192xf32, #tpu.memory_space<vmem>>, vector<4x192xf32>
    %13 = arith.truncf %12 : vector<4x192xf32> to vector<4x192xbf16>
    %c0_5 = arith.constant 0 : index
    %c0_6 = arith.constant 0 : index
    %14 = vector.load %arg3[%c0_5, %c0_6] : memref<192x128xbf16, #tpu.memory_space<vmem>>, vector<192x128xbf16>
    %cst = arith.constant dense<0.000000e+00> : vector<4x128xf32>
    %15 = tpu.matmul %13, %14, %cst {dimension_numbers = #tpu.dot_dimension_numbers<[1], [0], [0], [1], [0, 0, 1, 1], [], []>} : vector<4x192xbf16>, vector<192x128xbf16>, vector<4x128xf32> -> vector<4x128xf32>
    %16 = vector.broadcast %1 : vector<1x128xf32> to vector<4x128xf32>
    %17 = arith.addf %15, %16 : vector<4x128xf32>
    %18 = arith.truncf %17 : vector<4x128xf32> to vector<4x128xbf16>
    %cst_7 = arith.constant dense<0.000000e+00> : vector<4x128xf32>
    %19 = tpu.matmul %18, %11, %cst_7 {dimension_numbers = #tpu.dot_dimension_numbers<[1], [0], [0], [1], [0, 0, 1, 1], [], []>} : vector<4x128xbf16>, vector<128x128xbf16>, vector<4x128xf32> -> vector<4x128xf32>
    %20 = arith.subf %17, %19 : vector<4x128xf32>
    %21 = arith.mulf %20, %20 : vector<4x128xf32>
    %22 = arith.truncf %21 : vector<4x128xf32> to vector<4x128xbf16>
    %cst_8 = arith.constant dense<0.000000e+00> : vector<4x128xf32>
    %23 = tpu.matmul %22, %11, %cst_8 {dimension_numbers = #tpu.dot_dimension_numbers<[1], [0], [0], [1], [0, 0, 1, 1], [], []>} : vector<4x128xbf16>, vector<128x128xbf16>, vector<4x128xf32> -> vector<4x128xf32>
    %cst_9 = arith.constant 9.99999974E-6 : f32
    %24 = vector.broadcast %cst_9 : f32 to vector<4x128xf32>
    %25 = arith.addf %23, %24 : vector<4x128xf32>
    %26 = math.rsqrt %25 : vector<4x128xf32>
    %27 = arith.mulf %20, %26 : vector<4x128xf32>
    %28 = vector.broadcast %2 : vector<1x128xf32> to vector<4x128xf32>
    %29 = arith.mulf %27, %28 : vector<4x128xf32>
    %30 = vector.broadcast %3 : vector<1x128xf32> to vector<4x128xf32>
    %31 = arith.addf %29, %30 : vector<4x128xf32>
    %cst_10 = arith.constant 0.000000e+00 : f32
    %32 = vector.broadcast %cst_10 : f32 to vector<4x128xf32>
    %33 = arith.maximumf %31, %32 : vector<4x128xf32>
    %c0_11 = arith.constant 0 : index
    %c0_12 = arith.constant 0 : index
    %34 = vector.load %arg2[%c0_11, %c0_12] : memref<4x96xf32, #tpu.memory_space<vmem>>, vector<4x96xf32>
    %35 = arith.truncf %34 : vector<4x96xf32> to vector<4x96xbf16>
    %c0_13 = arith.constant 0 : index
    %c0_14 = arith.constant 0 : index
    %36 = vector.load %arg4[%c0_13, %c0_14] : memref<96x128xbf16, #tpu.memory_space<vmem>>, vector<96x128xbf16>
    %cst_15 = arith.constant dense<0.000000e+00> : vector<4x128xf32>
    %37 = tpu.matmul %35, %36, %cst_15 {dimension_numbers = #tpu.dot_dimension_numbers<[1], [0], [0], [1], [0, 0, 1, 1], [], []>} : vector<4x96xbf16>, vector<96x128xbf16>, vector<4x128xf32> -> vector<4x128xf32>
    %38 = vector.broadcast %4 : vector<1x128xf32> to vector<4x128xf32>
    %39 = arith.addf %37, %38 : vector<4x128xf32>
    %40 = arith.truncf %39 : vector<4x128xf32> to vector<4x128xbf16>
    %cst_16 = arith.constant dense<0.000000e+00> : vector<4x128xf32>
    %41 = tpu.matmul %40, %11, %cst_16 {dimension_numbers = #tpu.dot_dimension_numbers<[1], [0], [0], [1], [0, 0, 1, 1], [], []>} : vector<4x128xbf16>, vector<128x128xbf16>, vector<4x128xf32> -> vector<4x128xf32>
    %42 = arith.subf %39, %41 : vector<4x128xf32>
    %43 = arith.mulf %42, %42 : vector<4x128xf32>
    %44 = arith.truncf %43 : vector<4x128xf32> to vector<4x128xbf16>
    %cst_17 = arith.constant dense<0.000000e+00> : vector<4x128xf32>
    %45 = tpu.matmul %44, %11, %cst_17 {dimension_numbers = #tpu.dot_dimension_numbers<[1], [0], [0], [1], [0, 0, 1, 1], [], []>} : vector<4x128xbf16>, vector<128x128xbf16>, vector<4x128xf32> -> vector<4x128xf32>
    %cst_18 = arith.constant 9.99999974E-6 : f32
    %46 = vector.broadcast %cst_18 : f32 to vector<4x128xf32>
    %47 = arith.addf %45, %46 : vector<4x128xf32>
    %48 = math.rsqrt %47 : vector<4x128xf32>
    %49 = arith.mulf %42, %48 : vector<4x128xf32>
    %50 = vector.broadcast %5 : vector<1x128xf32> to vector<4x128xf32>
    %51 = arith.mulf %49, %50 : vector<4x128xf32>
    %52 = vector.broadcast %6 : vector<1x128xf32> to vector<4x128xf32>
    %53 = arith.addf %51, %52 : vector<4x128xf32>
    %cst_19 = arith.constant 0.000000e+00 : f32
    %54 = vector.broadcast %cst_19 : f32 to vector<4x128xf32>
    %55 = arith.maximumf %53, %54 : vector<4x128xf32>
    %56 = arith.truncf %33 : vector<4x128xf32> to vector<4x128xbf16>
    %c0_20 = arith.constant 0 : index
    %c0_21 = arith.constant 0 : index
    %57 = vector.load %arg5[%c0_20, %c0_21] : memref<128x128xbf16, #tpu.memory_space<vmem>>, vector<128x128xbf16>
    %cst_22 = arith.constant dense<0.000000e+00> : vector<4x128xf32>
    %58 = tpu.matmul %56, %57, %cst_22 {dimension_numbers = #tpu.dot_dimension_numbers<[1], [0], [0], [1], [0, 0, 1, 1], [], []>} : vector<4x128xbf16>, vector<128x128xbf16>, vector<4x128xf32> -> vector<4x128xf32>
    %59 = arith.truncf %55 : vector<4x128xf32> to vector<4x128xbf16>
    %c0_23 = arith.constant 0 : index
    %c0_24 = arith.constant 0 : index
    %60 = vector.load %arg6[%c0_23, %c0_24] : memref<128x128xbf16, #tpu.memory_space<vmem>>, vector<128x128xbf16>
    %cst_25 = arith.constant dense<0.000000e+00> : vector<4x128xf32>
    %61 = tpu.matmul %59, %60, %cst_25 {dimension_numbers = #tpu.dot_dimension_numbers<[1], [0], [0], [1], [0, 0, 1, 1], [], []>} : vector<4x128xbf16>, vector<128x128xbf16>, vector<4x128xf32> -> vector<4x128xf32>
    %62 = arith.addf %58, %61 : vector<4x128xf32>
    %63 = vector.broadcast %7 : vector<1x128xf32> to vector<4x128xf32>
    %64 = arith.addf %62, %63 : vector<4x128xf32>
    %65 = arith.truncf %64 : vector<4x128xf32> to vector<4x128xbf16>
    %cst_26 = arith.constant dense<0.000000e+00> : vector<4x128xf32>
    %66 = tpu.matmul %65, %11, %cst_26 {dimension_numbers = #tpu.dot_dimension_numbers<[1], [0], [0], [1], [0, 0, 1, 1], [], []>} : vector<4x128xbf16>, vector<128x128xbf16>, vector<4x128xf32> -> vector<4x128xf32>
    %67 = arith.subf %64, %66 : vector<4x128xf32>
    %68 = arith.mulf %67, %67 : vector<4x128xf32>
    %69 = arith.truncf %68 : vector<4x128xf32> to vector<4x128xbf16>
    %cst_27 = arith.constant dense<0.000000e+00> : vector<4x128xf32>
    %70 = tpu.matmul %69, %11, %cst_27 {dimension_numbers = #tpu.dot_dimension_numbers<[1], [0], [0], [1], [0, 0, 1, 1], [], []>} : vector<4x128xbf16>, vector<128x128xbf16>, vector<4x128xf32> -> vector<4x128xf32>
    %cst_28 = arith.constant 9.99999974E-6 : f32
    %71 = vector.broadcast %cst_28 : f32 to vector<4x128xf32>
    %72 = arith.addf %70, %71 : vector<4x128xf32>
    %73 = math.rsqrt %72 : vector<4x128xf32>
    %74 = arith.mulf %67, %73 : vector<4x128xf32>
    %75 = vector.broadcast %8 : vector<1x128xf32> to vector<4x128xf32>
    %76 = arith.mulf %74, %75 : vector<4x128xf32>
    %77 = vector.broadcast %9 : vector<1x128xf32> to vector<4x128xf32>
    %78 = arith.addf %76, %77 : vector<4x128xf32>
    %cst_29 = arith.constant 0.000000e+00 : f32
    %79 = vector.broadcast %cst_29 : f32 to vector<4x128xf32>
    %80 = arith.maximumf %78, %79 : vector<4x128xf32>
    %81 = arith.truncf %80 : vector<4x128xf32> to vector<4x128xbf16>
    %c0_30 = arith.constant 0 : index
    %c0_31 = arith.constant 0 : index
    %82 = vector.load %arg7[%c0_30, %c0_31] : memref<128x128xbf16, #tpu.memory_space<vmem>>, vector<128x128xbf16>
    %cst_32 = arith.constant dense<0.000000e+00> : vector<4x128xf32>
    %83 = tpu.matmul %81, %82, %cst_32 {dimension_numbers = #tpu.dot_dimension_numbers<[1], [0], [0], [1], [0, 0, 1, 1], [], []>} : vector<4x128xbf16>, vector<128x128xbf16>, vector<4x128xf32> -> vector<4x128xf32>
    %84 = vector.broadcast %10 : vector<1x128xf32> to vector<4x128xf32>
    %85 = arith.addf %83, %84 : vector<4x128xf32>
    %c0_33 = arith.constant 0 : index
    %c0_34 = arith.constant 0 : index
    %86 = vector.load %arg10[%c0_33, %c0_34] : memref<4x128xf32, #tpu.memory_space<vmem>>, vector<4x128xf32>
    tpu.vector_store %arg10[%c0_33, %c0_34], %85 {strides = array<i32>} : memref<4x128xf32, #tpu.memory_space<vmem>>, vector<4x128xf32>,
    return
  }
  func.func @transform_0(%arg0: i32) -> (i32, i32) {
    %c0_i32 = arith.constant 0 : i32
    %c0_i32_0 = arith.constant 0 : i32
    return %arg0, %c0_i32 : i32, i32
  }
  func.func @transform_1(%arg0: i32) -> (i32, i32) {
    %c0_i32 = arith.constant 0 : i32
    %c0_i32_0 = arith.constant 0 : i32
    return %arg0, %c0_i32 : i32, i32
  }
  func.func @transform_2(%arg0: i32) -> (i32, i32) {
    %c0_i32 = arith.constant 0 : i32
    %c0_i32_0 = arith.constant 0 : i32
    %c0_i32_1 = arith.constant 0 : i32
    return %c0_i32, %c0_i32_0 : i32, i32
  }
  func.func @transform_3(%arg0: i32) -> (i32, i32) {
    %c0_i32 = arith.constant 0 : i32
    %c0_i32_0 = arith.constant 0 : i32
    %c0_i32_1 = arith.constant 0 : i32
    return %c0_i32, %c0_i32_0 : i32, i32
  }
  func.func @transform_4(%arg0: i32) -> (i32, i32) {
    %c0_i32 = arith.constant 0 : i32
    %c0_i32_0 = arith.constant 0 : i32
    %c0_i32_1 = arith.constant 0 : i32
    return %c0_i32, %c0_i32_0 : i32, i32
  }
  func.func @transform_5(%arg0: i32) -> (i32, i32) {
    %c0_i32 = arith.constant 0 : i32
    %c0_i32_0 = arith.constant 0 : i32
    %c0_i32_1 = arith.constant 0 : i32
    return %c0_i32, %c0_i32_0 : i32, i32
  }
  func.func @transform_6(%arg0: i32) -> (i32, i32) {
    %c0_i32 = arith.constant 0 : i32
    %c0_i32_0 = arith.constant 0 : i32
    %c0_i32_1 = arith.constant 0 : i32
    return %c0_i32, %c0_i32_0 : i32, i32
  }
  func.func @transform_7(%arg0: i32) -> (i32, i32) {
    %c0_i32 = arith.constant 0 : i32
    %c0_i32_0 = arith.constant 0 : i32
    %c0_i32_1 = arith.constant 0 : i32
    return %c0_i32, %c0_i32_0 : i32, i32
  }
  func.func @transform_8(%arg0: i32) -> (i32, i32) {
    %c0_i32 = arith.constant 0 : i32
    %c0_i32_0 = arith.constant 0 : i32
    %c0_i32_1 = arith.constant 0 : i32
    return %c0_i32, %c0_i32_0 : i32, i32
  }
  func.func @transform_9(%arg0: i32) -> (i32, i32) {
    %c0_i32 = arith.constant 0 : i32
    %c0_i32_0 = arith.constant 0 : i32
    return %arg0, %c0_i32 : i32, i32
  }
}

</mosaic_0001>

<llo_original>
// kernel: tpu_custom_call.1
$region0: #{tpu_custom_call.1}
  #allocation0 [shape = 'u32[]', space=smem, size = 0x4, offset = 0x4, fixed_abs, tag = 'smem constant byte address 0x4 - core index']
  #allocation1 [shape = 'u32[144,128]{1,0:T(1,128)}', space=vmem, size = 0x12000, scoped, tag = 'internal scratch']
  %s0 = inlined_call_operand.hbm [shape: f32[4,192], index: 0, kind: input, shape index: {}]
  %s1 = inlined_call_operand.hbm [shape: f32[4,96], index: 1, kind: input, shape index: {}]
  %s2 = inlined_call_operand.hbm [shape: bf16[192,128], index: 2, kind: input, shape index: {}]
  %s3 = inlined_call_operand.hbm [shape: bf16[96,128], index: 3, kind: input, shape index: {}]
  %s4 = inlined_call_operand.hbm [shape: bf16[128,128], index: 4, kind: input, shape index: {}]
  %s5 = inlined_call_operand.hbm [shape: bf16[128,128], index: 5, kind: input, shape index: {}]
  %s6 = inlined_call_operand.hbm [shape: bf16[128,128], index: 6, kind: input, shape index: {}]
  %s7 = inlined_call_operand.hbm [shape: bf16[128,128], index: 7, kind: input, shape index: {}]
  %s8 = inlined_call_operand.vmem [shape: f32[10,128], index: 8, kind: input, shape index: {}]
  %s9 = inlined_call_operand.hbm [shape: f32[4,128], index: 9, kind: output, shape index: {}]
  %s10 = sld [smem:[#allocation0]]
  $region78: #{tpu_custom_call.1} parent=0
    _
  %s12 = ssub.s32 1, %s10
  %s13 = scalar_select 0, %s12, %s10
  $region1: #{tpu_custom_call.1} parent=0
    #allocation2 [shape = 'u8[4096]{0}', space=vmem, size = 0x1000, scoped, tag = 'input window, operand 0, single buffered']
    #allocation3 [shape = 's32[1]{0}', space=sflag, size = 0x4, scoped, tag = 'scoped memory for tpu_custom_call.1']
    #allocation4 [shape = 's32[1]{0}', space=sflag, size = 0x4, scoped, tag = 'scoped memory for tpu_custom_call.1']
    #allocation5 [shape = 'u8[2048]{0}', space=vmem, size = 0x800, scoped, tag = 'input window, operand 1, single buffered']
    #allocation6 [shape = 's32[1]{0}', space=sflag, size = 0x4, scoped, tag = 'scoped memory for tpu_custom_call.1']
    #allocation7 [shape = 'u8[49152]{0}', space=vmem, size = 0xc000, scoped, tag = 'input window, operand 2, single buffered']
    #allocation8 [shape = 'u8[24576]{0}', space=vmem, size = 0x6000, scoped, tag = 'input window, operand 3, single buffered']
    #allocation9 [shape = 's32[1]{0}', space=sflag, size = 0x4, scoped, tag = 'scoped memory for tpu_custom_call.1']
    #allocation10 [shape = 'u8[32768]{0}', space=vmem, size = 0x8000, scoped, tag = 'input window, operand 4, single buffered']
    #allocation11 [shape = 'u8[32768]{0}', space=vmem, size = 0x8000, scoped, tag = 'input window, operand 5, single buffered']
    #allocation12 [shape = 's32[1]{0}', space=sflag, size = 0x4, scoped, tag = 'scoped memory for tpu_custom_call.1']
    #allocation13 [shape = 'u8[32768]{0}', space=vmem, size = 0x8000, scoped, tag = 'input window, operand 6, single buffered']
    #allocation14 [shape = 'u8[32768]{0}', space=vmem, size = 0x8000, scoped, tag = 'input window, operand 7, single buffered']
    #allocation15 [shape = 's32[1]{0}', space=sflag, size = 0x4, scoped, tag = 'scoped memory for tpu_custom_call.1']
    #allocation16 [shape = 'u8[2048]{0}', space=vmem, size = 0x800, scoped, tag = 'output window, operand 0, single buffered']
    %14 = vsyncpa [#allocation3], 0
    %15 = vsyncpa [#allocation6], 0
    %16 = vsyncpa [#allocation9], 0
    %17 = vsyncpa [#allocation12], 0
    %18 = vsyncpa [#allocation15], 0
    %19 = vsyncpa [#allocation4], 0
    // Predicated region
    $region2: #{tpu_custom_call.1} parent=1 // pred_check
      _
    $region3: #{tpu_custom_call.1} parent=1 // pred_check_branch
      %21 = sbr.rel (0) target = $region5
    $region4: #{tpu_custom_call.1} parent=1 // pred_region
      %s23 = ssub.s32 128, 128
      %24 = vsyncadd [#allocation3], %s23
      %s26 = sshll.u32 [#allocation2], 4
      %s27 = int_to_ptr.vmem [resolvable:$true] %s26
      %29 = dma.hbm_to_vmem [thread:$0]  %s0, 128, %s27, [#allocation3]
    $region5: #{tpu_custom_call.1} parent=1 // pred_fallthru
      _
    // Predicated region
    $region6: #{tpu_custom_call.1} parent=1 // pred_check
      _
    $region7: #{tpu_custom_call.1} parent=1 // pred_check_branch
      %31 = sbr.rel (0) target = $region9
    $region8: #{tpu_custom_call.1} parent=1 // pred_region
      %s33 = ssub.s32 64, 64
      %34 = vsyncadd [#allocation6], %s33
      %s36 = sshll.u32 [#allocation5], 4
      %s37 = int_to_ptr.vmem [resolvable:$true] %s36
      %39 = dma.hbm_to_vmem [thread:$0]  %s1, 64, %s37, [#allocation6]
    $region9: #{tpu_custom_call.1} parent=1 // pred_fallthru
      _
    // Predicated region
    $region10: #{tpu_custom_call.1} parent=1 // pred_check
      _
    $region11: #{tpu_custom_call.1} parent=1 // pred_check_branch
      %41 = sbr.rel (0) target = $region13
    $region12: #{tpu_custom_call.1} parent=1 // pred_region
      %s43 = ssub.s32 1536, 1536
      %44 = vsyncadd [#allocation6], %s43
      %s45 = sshll.u32 [#allocation7], 4
      %s46 = int_to_ptr.vmem [resolvable:$true] %s45
      %51 = dma.hbm_to_vmem [thread:$0]  %s2, 1536, %s46, [#allocation6], 64, 64, 4
    $region13: #{tpu_custom_call.1} parent=1 // pred_fallthru
      _
    // Predicated region
    $region14: #{tpu_custom_call.1} parent=1 // pred_check
      _
    $region15: #{tpu_custom_call.1} parent=1 // pred_check_branch
      %53 = sbr.rel (0) target = $region17
    $region16: #{tpu_custom_call.1} parent=1 // pred_region
      %s55 = ssub.s32 768, 768
      %56 = vsyncadd [#allocation9], %s55
      %s57 = sshll.u32 [#allocation8], 4
      %s58 = int_to_ptr.vmem [resolvable:$true] %s57
      %63 = dma.hbm_to_vmem [thread:$0]  %s3, 768, %s58, [#allocation9], 64, 64, 4
    $region17: #{tpu_custom_call.1} parent=1 // pred_fallthru
      _
    // Predicated region
    $region18: #{tpu_custom_call.1} parent=1 // pred_check
      _
    $region19: #{tpu_custom_call.1} parent=1 // pred_check_branch
      %65 = sbr.rel (0) target = $region21
    $region20: #{tpu_custom_call.1} parent=1 // pred_region
      %s67 = ssub.s32 1024, 1024
      %68 = vsyncadd [#allocation9], %s67
      %s69 = sshll.u32 [#allocation10], 4
      %s70 = int_to_ptr.vmem [resolvable:$true] %s69
      %75 = dma.hbm_to_vmem [thread:$0]  %s4, 1024, %s70, [#allocation9], 64, 64, 4
    $region21: #{tpu_custom_call.1} parent=1 // pred_fallthru
      _
    // Predicated region
    $region22: #{tpu_custom_call.1} parent=1 // pred_check
      _
    $region23: #{tpu_custom_call.1} parent=1 // pred_check_branch
      %77 = sbr.rel (0) target = $region25
    $region24: #{tpu_custom_call.1} parent=1 // pred_region
      %s79 = ssub.s32 1024, 1024
      %80 = vsyncadd [#allocation12], %s79
      %s81 = sshll.u32 [#allocation11], 4
      %s82 = int_to_ptr.vmem [resolvable:$true] %s81
      %87 = dma.hbm_to_vmem [thread:$0]  %s5, 1024, %s82, [#allocation12], 64, 64, 4
    $region25: #{tpu_custom_call.1} parent=1 // pred_fallthru
      _
    // Predicated region
    $region26: #{tpu_custom_call.1} parent=1 // pred_check
      _
    $region27: #{tpu_custom_call.1} parent=1 // pred_check_branch
      %89 = sbr.rel (0) target = $region29
    $region28: #{tpu_custom_call.1} parent=1 // pred_region
      %s91 = ssub.s32 1024, 1024
      %92 = vsyncadd [#allocation12], %s91
      %s93 = sshll.u32 [#allocation13], 4
      %s94 = int_to_ptr.vmem [resolvable:$true] %s93
      %99 = dma.hbm_to_vmem [thread:$0]  %s6, 1024, %s94, [#allocation12], 64, 64, 4
    $region29: #{tpu_custom_call.1} parent=1 // pred_fallthru
      _
    // Predicated region
    $region30: #{tpu_custom_call.1} parent=1 // pred_check
      _
    $region31: #{tpu_custom_call.1} parent=1 // pred_check_branch
      %101 = sbr.rel (0) target = $region33
    $region32: #{tpu_custom_call.1} parent=1 // pred_region
      %s103 = ssub.s32 1024, 1024
      %104 = vsyncadd [#allocation15], %s103
      %s105 = sshll.u32 [#allocation14], 4
      %s106 = int_to_ptr.vmem [resolvable:$true] %s105
      %111 = dma.hbm_to_vmem [thread:$0]  %s7, 1024, %s106, [#allocation15], 64, 64, 4
    $region33: #{tpu_custom_call.1} parent=1 // pred_fallthru
      _
    // Predicated region
    $region34: #{tpu_custom_call.1} parent=1 // pred_check
      _
    $region35: #{tpu_custom_call.1} parent=1 // pred_check_branch
      %113 = sbr.rel (0) target = $region37
    $region36: #{tpu_custom_call.1} parent=1 // pred_region
      _
    $region37: #{tpu_custom_call.1} parent=1 // pred_fallthru
      _
    // Predicated region
    $region38: #{tpu_custom_call.1} parent=1 // pred_check
      _
    $region39: #{tpu_custom_call.1} parent=1 // pred_check_branch
      %115 = sbr.rel (0) target = $region41
    $region40: #{tpu_custom_call.1} parent=1 // pred_region
      %116 = dma.done [#allocation3], 128
    $region41: #{tpu_custom_call.1} parent=1 // pred_fallthru
      _
    // Predicated region
    $region42: #{tpu_custom_call.1} parent=1 // pred_check
      _
    $region43: #{tpu_custom_call.1} parent=1 // pred_check_branch
      %118 = sbr.rel (0) target = $region45
    $region44: #{tpu_custom_call.1} parent=1 // pred_region
      %119 = dma.done [#allocation6], 64
    $region45: #{tpu_custom_call.1} parent=1 // pred_fallthru
      _
    // Predicated region
    $region46: #{tpu_custom_call.1} parent=1 // pred_check
      _
    $region47: #{tpu_custom_call.1} parent=1 // pred_check_branch
      %121 = sbr.rel (0) target = $region49
    $region48: #{tpu_custom_call.1} parent=1 // pred_region
      %122 = dma.done [#allocation6], 1536
    $region49: #{tpu_custom_call.1} parent=1 // pred_fallthru
      _
    // Predicated region
    $region50: #{tpu_custom_call.1} parent=1 // pred_check
      _
    $region51: #{tpu_custom_call.1} parent=1 // pred_check_branch
      %124 = sbr.rel (0) target = $region53
    $region52: #{tpu_custom_call.1} parent=1 // pred_region
      %125 = dma.done [#allocation9], 768
    $region53: #{tpu_custom_call.1} parent=1 // pred_fallthru
      _
    // Predicated region
    $region54: #{tpu_custom_call.1} parent=1 // pred_check
      _
    $region55: #{tpu_custom_call.1} parent=1 // pred_check_branch
      %127 = sbr.rel (0) target = $region57
    $region56: #{tpu_custom_call.1} parent=1 // pred_region
      %128 = dma.done [#allocation9], 1024
    $region57: #{tpu_custom_call.1} parent=1 // pred_fallthru
      _
    // Predicated region
    $region58: #{tpu_custom_call.1} parent=1 // pred_check
      _
    $region59: #{tpu_custom_call.1} parent=1 // pred_check_branch
      %130 = sbr.rel (0) target = $region61
    $region60: #{tpu_custom_call.1} parent=1 // pred_region
      %131 = dma.done [#allocation12], 1024
    $region61: #{tpu_custom_call.1} parent=1 // pred_fallthru
      _
    // Predicated region
    $region62: #{tpu_custom_call.1} parent=1 // pred_check
      _
    $region63: #{tpu_custom_call.1} parent=1 // pred_check_branch
      %133 = sbr.rel (0) target = $region65
    $region64: #{tpu_custom_call.1} parent=1 // pred_region
      %134 = dma.done [#allocation12], 1024
    $region65: #{tpu_custom_call.1} parent=1 // pred_fallthru
      _
    // Predicated region
    $region66: #{tpu_custom_call.1} parent=1 // pred_check
      _
    $region67: #{tpu_custom_call.1} parent=1 // pred_check_branch
      %136 = sbr.rel (0) target = $region69
    $region68: #{tpu_custom_call.1} parent=1 // pred_region
      %137 = dma.done [#allocation15], 1024
    $region69: #{tpu_custom_call.1} parent=1 // pred_fallthru
      _
    %v139 = vld [vmem:[%s8] sm:$0xff]
    %v140 = vld [vmem:[%s8 + $0x8] sm:$0x3]
    %v141 = vld [vmem:[#allocation14] sm:$0xf]
    %v142 = vld [vmem:[#allocation14 + $0x4] sm:$0xf]
    %v143 = vld [vmem:[#allocation14 + $0x8] sm:$0xf]
    %v144 = vld [vmem:[#allocation14 + $0xc] sm:$0xf]
    %v145 = vld [vmem:[#allocation14 + $0x10] sm:$0xf]
    %v146 = vld [vmem:[#allocation14 + $0x14] sm:$0xf]
    %v147 = vld [vmem:[#allocation14 + $0x18] sm:$0xf]
    %v148 = vld [vmem:[#allocation14 + $0x1c] sm:$0xf]
    %v149 = vld [vmem:[#allocation14 + $0x20] sm:$0xf]
    %v150 = vld [vmem:[#allocation14 + $0x24] sm:$0xf]
    %v151 = vld [vmem:[#allocation14 + $0x28] sm:$0xf]
    %v152 = vld [vmem:[#allocation14 + $0x2c] sm:$0xf]
    %v153 = vld [vmem:[#allocation14 + $0x30] sm:$0xf]
    %v154 = vld [vmem:[#allocation14 + $0x34] sm:$0xf]
    %v155 = vld [vmem:[#allocation14 + $0x38] sm:$0xf]
    %v156 = vld [vmem:[#allocation14 + $0x3c] sm:$0xf]
    %v157 = vld [vmem:[#allocation2] sm:$0xff]
    %v159 = vcombine.high %v157, %v157
    %v161 = vpack.c.bf16 %v157, %v157
    %v162 = vpack.c.bf16 %v159, %v159
    %v163 = vld [vmem:[#allocation7] sm:$0xf]
    %v164 = vld [vmem:[#allocation7 + $0x4] sm:$0xf]
    %v165 = vld [vmem:[#allocation7 + $0x8] sm:$0xf]
    %v166 = vld [vmem:[#allocation7 + $0xc] sm:$0xf]
    %v167 = vld [vmem:[#allocation7 + $0x10] sm:$0xf]
    %v168 = vld [vmem:[#allocation7 + $0x14] sm:$0xf]
    %v169 = vld [vmem:[#allocation7 + $0x18] sm:$0xf]
    %v170 = vld [vmem:[#allocation7 + $0x1c] sm:$0xf]
    %v171 = vld [vmem:[#allocation7 + $0x20] sm:$0xf]
    %v172 = vld [vmem:[#allocation7 + $0x24] sm:$0xf]
    %v173 = vld [vmem:[#allocation7 + $0x28] sm:$0xf]
    %v174 = vld [vmem:[#allocation7 + $0x2c] sm:$0xf]
    %v175 = vld [vmem:[#allocation7 + $0x30] sm:$0xf]
    %v176 = vld [vmem:[#allocation7 + $0x34] sm:$0xf]
    %v177 = vld [vmem:[#allocation7 + $0x38] sm:$0xf]
    %v178 = vld [vmem:[#allocation7 + $0x3c] sm:$0xf]
    %v179 = vld [vmem:[#allocation7 + $0x40] sm:$0xf]
    %v180 = vld [vmem:[#allocation7 + $0x44] sm:$0xf]
    %v181 = vld [vmem:[#allocation7 + $0x48] sm:$0xf]
    %v182 = vld [vmem:[#allocation7 + $0x4c] sm:$0xf]
    %v183 = vld [vmem:[#allocation7 + $0x50] sm:$0xf]
    %v184 = vld [vmem:[#allocation7 + $0x54] sm:$0xf]
    %v185 = vld [vmem:[#allocation7 + $0x58] sm:$0xf]
    %v186 = vld [vmem:[#allocation7 + $0x5c] sm:$0xf]
    %v187 = vlaneseq
    %v188 = vshrl.u32 %v187, 7
    %v189 = vsub.s32 0, %v188
    %v190 = vrot.slane %v139, %v189
    %v215 = vunpack.c.l.b16 %v163
    %v216 = vunpack.c.l.b16 %v164
    %v217 = vunpack.c.l.b16 %v165
    %v218 = vunpack.c.l.b16 %v166
    %v219 = vunpack.c.l.b16 %v167
    %v220 = vunpack.c.l.b16 %v168
    %v221 = vunpack.c.l.b16 %v169
    %v222 = vunpack.c.l.b16 %v170
    %v223 = vunpack.c.l.b16 %v171
    %v224 = vunpack.c.l.b16 %v172
    %v225 = vunpack.c.l.b16 %v173
    %v226 = vunpack.c.l.b16 %v174
    %v227 = vunpack.c.l.b16 %v175
    %v228 = vunpack.c.l.b16 %v176
    %v229 = vunpack.c.l.b16 %v177
    %v230 = vunpack.c.l.b16 %v178
    %v231 = vunpack.c.l.b16 %v179
    %v232 = vunpack.c.l.b16 %v180
    %v233 = vunpack.c.l.b16 %v181
    %v234 = vunpack.c.l.b16 %v182
    %v235 = vunpack.c.l.b16 %v183
    %v236 = vunpack.c.l.b16 %v184
    %v237 = vunpack.c.l.b16 %v185
    %v238 = vunpack.c.l.b16 %v186
    %v239 = vpack.c.b16 %v216, %v215
    %v240 = vpack.c.b16 %v218, %v217
    %v241 = vpack.c.b16 %v220, %v219
    %v242 = vpack.c.b16 %v222, %v221
    %v243 = vpack.c.b16 %v224, %v223
    %v244 = vpack.c.b16 %v226, %v225
    %v245 = vpack.c.b16 %v228, %v227
    %v246 = vpack.c.b16 %v230, %v229
    %v247 = vpack.c.b16 %v232, %v231
    %v248 = vpack.c.b16 %v234, %v233
    %v249 = vpack.c.b16 %v236, %v235
    %v250 = vpack.c.b16 %v238, %v237
    %vm263 = vcmask 523264
    %v265 = vsel %vm263, %v162, 0
    %267 = vmatprep.subr.bf16.mxu0 0
    %268 = vmatpush1.bf16.msra.mxu0 %v239
    %269 = vmatprep.subr.bf16.mxu0 0
    %270 = vmatpush1.bf16.msra.mxu0 %v240
    %271 = vmatprep.subr.bf16.mxu0 0
    %272 = vmatpush1.bf16.msra.mxu0 %v241
    %273 = vmatprep.subr.bf16.mxu0 0
    %274 = vmatpush1.bf16.msra.mxu0 %v242
    %275 = vmatprep.subr.bf16.mxu0 0
    %276 = vmatpush1.bf16.msra.mxu0 %v243
    %277 = vmatprep.subr.bf16.mxu0 0
    %278 = vmatpush1.bf16.msra.mxu0 %v244
    %279 = vmatprep.subr.bf16.mxu0 0
    %280 = vmatpush1.bf16.msra.mxu0 %v245
    %281 = vmatprep.subr.bf16.mxu0 0
    %282 = vmatpush1.bf16.msra.mxu0 %v246
    %283 = vmatprep.subr.bf16.mxu0 0
    %284 = vmatpush1.bf16.msra.mxu0 %v247
    %285 = vmatprep.subr.bf16.mxu0 0
    %286 = vmatpush1.bf16.msra.mxu0 %v248
    %287 = vmatprep.subr.bf16.mxu0 0
    %288 = vmatpush1.bf16.msra.mxu0 %v249
    %289 = vmatprep.subr.bf16.mxu0 0
    %290 = vmatpush1.bf16.msra.mxu0 %v250
    %291 = vmatprep.subr.bf16.mxu0 0
    %292 = vmatpush1.bf16.msra.mxu0 0
    %293 = vmatprep.subr.bf16.mxu0 0
    %294 = vmatpush1.bf16.msra.mxu0 0
    %295 = vmatprep.subr.bf16.mxu0 0
    %296 = vmatpush1.bf16.msra.mxu0 0
    %297 = vmatprep.subr.bf16.mxu0 0
    %298 = vmatpush1.bf16.msra.mxu0 0
    %299 = vmatprep.mubr.bf16.mxu0 %v265
    %300 = vmatmul.mubr.bf16.gmra.mrb[0].mxu0 %v161
    %v301 = vpop.f32.mrb[0].mxu0
    %v302 = vadd.f32 %v190, %v301
    %v303 = vpop.f32.mrb[0].mxu0
    %v304 = vpop.f32.mrb[0].mxu0
    %v305 = vpop.f32.mrb[0].mxu0
    %306 = vdwg.mxu0
    %v307 = vpack.c.bf16 %v302, %v302
    %v324 = vunpack.c.l.b16 %v141
    %v325 = vunpack.c.l.b16 %v142
    %v326 = vunpack.c.l.b16 %v143
    %v327 = vunpack.c.l.b16 %v144
    %v328 = vunpack.c.l.b16 %v145
    %v329 = vunpack.c.l.b16 %v146
    %v330 = vunpack.c.l.b16 %v147
    %v331 = vunpack.c.l.b16 %v148
    %v332 = vunpack.c.l.b16 %v149
    %v333 = vunpack.c.l.b16 %v150
    %v334 = vunpack.c.l.b16 %v151
    %v335 = vunpack.c.l.b16 %v152
    %v336 = vunpack.c.l.b16 %v153
    %v337 = vunpack.c.l.b16 %v154
    %v338 = vunpack.c.l.b16 %v155
    %v339 = vunpack.c.l.b16 %v156
    %v340 = vpack.c.b16 %v325, %v324
    %v341 = vpack.c.b16 %v327, %v326
    %v342 = vpack.c.b16 %v329, %v328
    %v343 = vpack.c.b16 %v331, %v330
    %v344 = vpack.c.b16 %v333, %v332
    %v345 = vpack.c.b16 %v335, %v334
    %v346 = vpack.c.b16 %v337, %v336
    %v347 = vpack.c.b16 %v339, %v338
    %356 = vmatprep.subr.bf16.mxu0 0
    %357 = vmatpush1.bf16.msra.mxu0 %v340
    %358 = vmatprep.subr.bf16.mxu0 0
    %359 = vmatpush1.bf16.msra.mxu0 %v341
    %360 = vmatprep.subr.bf16.mxu0 0
    %361 = vmatpush1.bf16.msra.mxu0 %v342
    %362 = vmatprep.subr.bf16.mxu0 0
    %363 = vmatpush1.bf16.msra.mxu0 %v343
    %364 = vmatprep.subr.bf16.mxu0 0
    %365 = vmatpush1.bf16.msra.mxu0 %v344
    %366 = vmatprep.subr.bf16.mxu0 0
    %367 = vmatpush1.bf16.msra.mxu0 %v345
    %368 = vmatprep.subr.bf16.mxu0 0
    %369 = vmatpush1.bf16.msra.mxu0 %v346
    %370 = vmatprep.subr.bf16.mxu0 0
    %371 = vmatpush1.bf16.msra.mxu0 %v347
    %372 = vmatprep.subr.bf16.mxu0 0
    %373 = vmatpush1.bf16.msra.mxu0 0
    %374 = vmatprep.subr.bf16.mxu0 0
    %375 = vmatpush1.bf16.msra.mxu0 0
    %376 = vmatprep.subr.bf16.mxu0 0
    %377 = vmatpush1.bf16.msra.mxu0 0
    %378 = vmatprep.subr.bf16.mxu0 0
    %379 = vmatpush1.bf16.msra.mxu0 0
    %380 = vmatprep.subr.bf16.mxu0 0
    %381 = vmatpush1.bf16.msra.mxu0 0
    %382 = vmatprep.subr.bf16.mxu0 0
    %383 = vmatpush1.bf16.msra.mxu0 0
    %384 = vmatprep.subr.bf16.mxu0 0
    %385 = vmatpush1.bf16.msra.mxu0 0
    %386 = vmatprep.subr.bf16.mxu0 0
    %387 = vmatpush1.bf16.msra.mxu0 0
    %388 = vmatprep.mubr.bf16.mxu0 0
    %389 = vmatmul.mubr.bf16.gmra.mrb[0].mxu0 %v307
    %v390 = vpop.f32.mrb[0].mxu0
    %v391 = vadd.f32 0.0, %v390
    %v392 = vpop.f32.mrb[0].mxu0
    %v393 = vpop.f32.mrb[0].mxu0
    %v394 = vpop.f32.mrb[0].mxu0
    %395 = vdwg.mxu0
    %v396 = vsub.f32 %v302, %v391
    %v397 = vmul.f32 %v396, %v396
    %v398 = vpack.c.bf16 %v397, %v397
    %399 = vmatprep.subr.bf16.mxu0 0
    %400 = vmatpush1.bf16.msra.mxu0 %v340
    %401 = vmatprep.subr.bf16.mxu0 0
    %402 = vmatpush1.bf16.msra.mxu0 %v341
    %403 = vmatprep.subr.bf16.mxu0 0
    %404 = vmatpush1.bf16.msra.mxu0 %v342
    %405 = vmatprep.subr.bf16.mxu0 0
    %406 = vmatpush1.bf16.msra.mxu0 %v343
    %407 = vmatprep.subr.bf16.mxu0 0
    %408 = vmatpush1.bf16.msra.mxu0 %v344
    %409 = vmatprep.subr.bf16.mxu0 0
    %410 = vmatpush1.bf16.msra.mxu0 %v345
    %411 = vmatprep.subr.bf16.mxu0 0
    %412 = vmatpush1.bf16.msra.mxu0 %v346
    %413 = vmatprep.subr.bf16.mxu0 0
    %414 = vmatpush1.bf16.msra.mxu0 %v347
    %415 = vmatprep.subr.bf16.mxu0 0
    %416 = vmatpush1.bf16.msra.mxu0 0
    %417 = vmatprep.subr.bf16.mxu0 0
    %418 = vmatpush1.bf16.msra.mxu0 0
    %419 = vmatprep.subr.bf16.mxu0 0
    %420 = vmatpush1.bf16.msra.mxu0 0
    %421 = vmatprep.subr.bf16.mxu0 0
    %422 = vmatpush1.bf16.msra.mxu0 0
    %423 = vmatprep.subr.bf16.mxu0 0
    %424 = vmatpush1.bf16.msra.mxu0 0
    %425 = vmatprep.subr.bf16.mxu0 0
    %426 = vmatpush1.bf16.msra.mxu0 0
    %427 = vmatprep.subr.bf16.mxu0 0
    %428 = vmatpush1.bf16.msra.mxu0 0
    %429 = vmatprep.subr.bf16.mxu0 0
    %430 = vmatpush1.bf16.msra.mxu0 0
    %431 = vmatprep.mubr.bf16.mxu0 0
    %432 = vmatmul.mubr.bf16.gmra.mrb[0].mxu0 %v398
    %v433 = vpop.f32.mrb[0].mxu0
    %v434 = vadd.f32 1e-05, %v433
    %v435 = vpop.f32.mrb[0].mxu0
    %v436 = vpop.f32.mrb[0].mxu0
    %v437 = vpop.f32.mrb[0].mxu0
    %438 = vdwg.mxu0
    %v439 = vrsqrt.pop %v434
    %v440 = vmul.f32 %v396, %v439
    %v441 = vlaneseq
    %v442 = vshrl.u32 %v441, 7
    %v443 = vsub.s32 1, %v442
    %v444 = vrot.slane %v139, %v443
    %v445 = vmul.f32 %v440, %v444
    %v446 = vlaneseq
    %v447 = vshrl.u32 %v446, 7
    %v448 = vsub.s32 2, %v447
    %v449 = vrot.slane %v139, %v448
    %v450 = vadd.f32 %v445, %v449
    %v451 = vmax.f32 %v450, 0.0
    %v452 = vld [vmem:[#allocation5] sm:$0xf]
    %v453 = vpack.c.bf16 %v452, %v452
    %v454 = vld [vmem:[#allocation8] sm:$0xf]
    %v455 = vld [vmem:[#allocation8 + $0x4] sm:$0xf]
    %v456 = vld [vmem:[#allocation8 + $0x8] sm:$0xf]
    %v457 = vld [vmem:[#allocation8 + $0xc] sm:$0xf]
    %v458 = vld [vmem:[#allocation8 + $0x10] sm:$0xf]
    %v459 = vld [vmem:[#allocation8 + $0x14] sm:$0xf]
    %v460 = vld [vmem:[#allocation8 + $0x18] sm:$0xf]
    %v461 = vld [vmem:[#allocation8 + $0x1c] sm:$0xf]
    %v462 = vld [vmem:[#allocation8 + $0x20] sm:$0xf]
    %v463 = vld [vmem:[#allocation8 + $0x24] sm:$0xf]
    %v464 = vld [vmem:[#allocation8 + $0x28] sm:$0xf]
    %v465 = vld [vmem:[#allocation8 + $0x2c] sm:$0xf]
    %v466 = vlaneseq
    %v467 = vshrl.u32 %v466, 7
    %v468 = vsub.s32 3, %v467
    %v469 = vrot.slane %v139, %v468
    %v482 = vunpack.c.l.b16 %v454
    %v483 = vunpack.c.l.b16 %v455
    %v484 = vunpack.c.l.b16 %v456
    %v485 = vunpack.c.l.b16 %v457
    %v486 = vunpack.c.l.b16 %v458
    %v487 = vunpack.c.l.b16 %v459
    %v488 = vunpack.c.l.b16 %v460
    %v489 = vunpack.c.l.b16 %v461
    %v490 = vunpack.c.l.b16 %v462
    %v491 = vunpack.c.l.b16 %v463
    %v492 = vunpack.c.l.b16 %v464
    %v493 = vunpack.c.l.b16 %v465
    %v494 = vpack.c.b16 %v483, %v482
    %v495 = vpack.c.b16 %v485, %v484
    %v496 = vpack.c.b16 %v487, %v486
    %v497 = vpack.c.b16 %v489, %v488
    %v498 = vpack.c.b16 %v491, %v490
    %v499 = vpack.c.b16 %v493, %v492
    %vm506 = vcmask 785408
    %v508 = vsel %vm506, %v453, 0
    %510 = vmatprep.subr.bf16.mxu0 0
    %511 = vmatpush1.bf16.msra.mxu0 %v494
    %512 = vmatprep.subr.bf16.mxu0 0
    %513 = vmatpush1.bf16.msra.mxu0 %v495
    %514 = vmatprep.subr.bf16.mxu0 0
    %515 = vmatpush1.bf16.msra.mxu0 %v496
    %516 = vmatprep.subr.bf16.mxu0 0
    %517 = vmatpush1.bf16.msra.mxu0 %v497
    %518 = vmatprep.subr.bf16.mxu0 0
    %519 = vmatpush1.bf16.msra.mxu0 %v498
    %520 = vmatprep.subr.bf16.mxu0 0
    %521 = vmatpush1.bf16.msra.mxu0 %v499
    %522 = vmatprep.subr.bf16.mxu0 0
    %523 = vmatpush1.bf16.msra.mxu0 0
    %524 = vmatprep.subr.bf16.mxu0 0
    %525 = vmatpush1.bf16.msra.mxu0 0
    %526 = vmatprep.subr.bf16.mxu0 0
    %527 = vmatpush1.bf16.msra.mxu0 0
    %528 = vmatprep.subr.bf16.mxu0 0
    %529 = vmatpush1.bf16.msra.mxu0 0
    %530 = vmatprep.subr.bf16.mxu0 0
    %531 = vmatpush1.bf16.msra.mxu0 0
    %532 = vmatprep.subr.bf16.mxu0 0
    %533 = vmatpush1.bf16.msra.mxu0 0
    %534 = vmatprep.subr.bf16.mxu0 0
    %535 = vmatpush1.bf16.msra.mxu0 0
    %536 = vmatprep.subr.bf16.mxu0 0
    %537 = vmatpush1.bf16.msra.mxu0 0
    %538 = vmatprep.subr.bf16.mxu0 0
    %539 = vmatpush1.bf16.msra.mxu0 0
    %540 = vmatprep.subr.bf16.mxu0 0
    %541 = vmatpush1.bf16.msra.mxu0 0
    %542 = vmatprep.mubr.bf16.mxu0 0
    %543 = vmatmul.mubr.bf16.gmra.mrb[0].mxu0 %v508
    %v544 = vpop.f32.mrb[0].mxu0
    %v545 = vadd.f32 %v469, %v544
    %v546 = vpop.f32.mrb[0].mxu0
    %v547 = vpop.f32.mrb[0].mxu0
    %v548 = vpop.f32.mrb[0].mxu0
    %549 = vdwg.mxu0
    %v550 = vpack.c.bf16 %v545, %v545
    %551 = vmatprep.subr.bf16.mxu0 0
    %552 = vmatpush1.bf16.msra.mxu0 %v340
    %553 = vmatprep.subr.bf16.mxu0 0
    %554 = vmatpush1.bf16.msra.mxu0 %v341
    %555 = vmatprep.subr.bf16.mxu0 0
    %556 = vmatpush1.bf16.msra.mxu0 %v342
    %557 = vmatprep.subr.bf16.mxu0 0
    %558 = vmatpush1.bf16.msra.mxu0 %v343
    %559 = vmatprep.subr.bf16.mxu0 0
    %560 = vmatpush1.bf16.msra.mxu0 %v344
    %561 = vmatprep.subr.bf16.mxu0 0
    %562 = vmatpush1.bf16.msra.mxu0 %v345
    %563 = vmatprep.subr.bf16.mxu0 0
    %564 = vmatpush1.bf16.msra.mxu0 %v346
    %565 = vmatprep.subr.bf16.mxu0 0
    %566 = vmatpush1.bf16.msra.mxu0 %v347
    %567 = vmatprep.subr.bf16.mxu0 0
    %568 = vmatpush1.bf16.msra.mxu0 0
    %569 = vmatprep.subr.bf16.mxu0 0
    %570 = vmatpush1.bf16.msra.mxu0 0
    %571 = vmatprep.subr.bf16.mxu0 0
    %572 = vmatpush1.bf16.msra.mxu0 0
    %573 = vmatprep.subr.bf16.mxu0 0
    %574 = vmatpush1.bf16.msra.mxu0 0
    %575 = vmatprep.subr.bf16.mxu0 0
    %576 = vmatpush1.bf16.msra.mxu0 0
    %577 = vmatprep.subr.bf16.mxu0 0
    %578 = vmatpush1.bf16.msra.mxu0 0
    %579 = vmatprep.subr.bf16.mxu0 0
    %580 = vmatpush1.bf16.msra.mxu0 0
    %581 = vmatprep.subr.bf16.mxu0 0
    %582 = vmatpush1.bf16.msra.mxu0 0
    %583 = vmatprep.mubr.bf16.mxu0 0
    %584 = vmatmul.mubr.bf16.gmra.mrb[0].mxu0 %v550
    %v585 = vpop.f32.mrb[0].mxu0
    %v586 = vadd.f32 0.0, %v585
    %v587 = vpop.f32.mrb[0].mxu0
    %v588 = vpop.f32.mrb[0].mxu0
    %v589 = vpop.f32.mrb[0].mxu0
    %590 = vdwg.mxu0
    %v591 = vsub.f32 %v545, %v586
    %v592 = vmul.f32 %v591, %v591
    %v593 = vpack.c.bf16 %v592, %v592
    %594 = vmatprep.subr.bf16.mxu0 0
    %595 = vmatpush1.bf16.msra.mxu0 %v340
    %596 = vmatprep.subr.bf16.mxu0 0
    %597 = vmatpush1.bf16.msra.mxu0 %v341
    %598 = vmatprep.subr.bf16.mxu0 0
    %599 = vmatpush1.bf16.msra.mxu0 %v342
    %600 = vmatprep.subr.bf16.mxu0 0
    %601 = vmatpush1.bf16.msra.mxu0 %v343
    %602 = vmatprep.subr.bf16.mxu0 0
    %603 = vmatpush1.bf16.msra.mxu0 %v344
    %604 = vmatprep.subr.bf16.mxu0 0
    %605 = vmatpush1.bf16.msra.mxu0 %v345
    %606 = vmatprep.subr.bf16.mxu0 0
    %607 = vmatpush1.bf16.msra.mxu0 %v346
    %608 = vmatprep.subr.bf16.mxu0 0
    %609 = vmatpush1.bf16.msra.mxu0 %v347
    %610 = vmatprep.subr.bf16.mxu0 0
    %611 = vmatpush1.bf16.msra.mxu0 0
    %612 = vmatprep.subr.bf16.mxu0 0
    %613 = vmatpush1.bf16.msra.mxu0 0
    %614 = vmatprep.subr.bf16.mxu0 0
    %615 = vmatpush1.bf16.msra.mxu0 0
    %616 = vmatprep.subr.bf16.mxu0 0
    %617 = vmatpush1.bf16.msra.mxu0 0
    %618 = vmatprep.subr.bf16.mxu0 0
    %619 = vmatpush1.bf16.msra.mxu0 0
    %620 = vmatprep.subr.bf16.mxu0 0
    %621 = vmatpush1.bf16.msra.mxu0 0
    %622 = vmatprep.subr.bf16.mxu0 0
    %623 = vmatpush1.bf16.msra.mxu0 0
    %624 = vmatprep.subr.bf16.mxu0 0
    %625 = vmatpush1.bf16.msra.mxu0 0
    %626 = vmatprep.mubr.bf16.mxu0 0
    %627 = vmatmul.mubr.bf16.gmra.mrb[0].mxu0 %v593
    %v628 = vpop.f32.mrb[0].mxu0
    %v629 = vadd.f32 1e-05, %v628
    %v630 = vpop.f32.mrb[0].mxu0
    %v631 = vpop.f32.mrb[0].mxu0
    %v632 = vpop.f32.mrb[0].mxu0
    %633 = vdwg.mxu0
    %v634 = vrsqrt.pop %v629
    %v635 = vmul.f32 %v591, %v634
    %v636 = vlaneseq
    %v637 = vshrl.u32 %v636, 7
    %v638 = vsub.s32 4, %v637
    %v639 = vrot.slane %v139, %v638
    %v640 = vmul.f32 %v635, %v639
    %v641 = vlaneseq
    %v642 = vshrl.u32 %v641, 7
    %v643 = vsub.s32 5, %v642
    %v644 = vrot.slane %v139, %v643
    %v645 = vadd.f32 %v640, %v644
    %v646 = vmax.f32 %v645, 0.0
    %v647 = vpack.c.bf16 %v451, %v451
    %v648 = vld [vmem:[#allocation10] sm:$0xf]
    %v649 = vld [vmem:[#allocation10 + $0x4] sm:$0xf]
    %v650 = vld [vmem:[#allocation10 + $0x8] sm:$0xf]
    %v651 = vld [vmem:[#allocation10 + $0xc] sm:$0xf]
    %v652 = vld [vmem:[#allocation10 + $0x10] sm:$0xf]
    %v653 = vld [vmem:[#allocation10 + $0x14] sm:$0xf]
    %v654 = vld [vmem:[#allocation10 + $0x18] sm:$0xf]
    %v655 = vld [vmem:[#allocation10 + $0x1c] sm:$0xf]
    %v656 = vld [vmem:[#allocation10 + $0x20] sm:$0xf]
    %v657 = vld [vmem:[#allocation10 + $0x24] sm:$0xf]
    %v658 = vld [vmem:[#allocation10 + $0x28] sm:$0xf]
    %v659 = vld [vmem:[#allocation10 + $0x2c] sm:$0xf]
    %v660 = vld [vmem:[#allocation10 + $0x30] sm:$0xf]
    %v661 = vld [vmem:[#allocation10 + $0x34] sm:$0xf]
    %v662 = vld [vmem:[#allocation10 + $0x38] sm:$0xf]
    %v663 = vld [vmem:[#allocation10 + $0x3c] sm:$0xf]
    %v664 = vpack.c.bf16 %v646, %v646
    %v665 = vld [vmem:[#allocation11] sm:$0xf]
    %v666 = vld [vmem:[#allocation11 + $0x4] sm:$0xf]
    %v667 = vld [vmem:[#allocation11 + $0x8] sm:$0xf]
    %v668 = vld [vmem:[#allocation11 + $0xc] sm:$0xf]
    %v669 = vld [vmem:[#allocation11 + $0x10] sm:$0xf]
    %v670 = vld [vmem:[#allocation11 + $0x14] sm:$0xf]
    %v671 = vld [vmem:[#allocation11 + $0x18] sm:$0xf]
    %v672 = vld [vmem:[#allocation11 + $0x1c] sm:$0xf]
    %v673 = vld [vmem:[#allocation11 + $0x20] sm:$0xf]
    %v674 = vld [vmem:[#allocation11 + $0x24] sm:$0xf]
    %v675 = vld [vmem:[#allocation11 + $0x28] sm:$0xf]
    %v676 = vld [vmem:[#allocation11 + $0x2c] sm:$0xf]
    %v677 = vld [vmem:[#allocation11 + $0x30] sm:$0xf]
    %v678 = vld [vmem:[#allocation11 + $0x34] sm:$0xf]
    %v679 = vld [vmem:[#allocation11 + $0x38] sm:$0xf]
    %v680 = vld [vmem:[#allocation11 + $0x3c] sm:$0xf]
    %v697 = vunpack.c.l.b16 %v665
    %v698 = vunpack.c.l.b16 %v666
    %v699 = vunpack.c.l.b16 %v667
    %v700 = vunpack.c.l.b16 %v668
    %v701 = vunpack.c.l.b16 %v669
    %v702 = vunpack.c.l.b16 %v670
    %v703 = vunpack.c.l.b16 %v671
    %v704 = vunpack.c.l.b16 %v672
    %v705 = vunpack.c.l.b16 %v673
    %v706 = vunpack.c.l.b16 %v674
    %v707 = vunpack.c.l.b16 %v675
    %v708 = vunpack.c.l.b16 %v676
    %v709 = vunpack.c.l.b16 %v677
    %v710 = vunpack.c.l.b16 %v678
    %v711 = vunpack.c.l.b16 %v679
    %v712 = vunpack.c.l.b16 %v680
    %v713 = vpack.c.b16 %v698, %v697
    %v714 = vpack.c.b16 %v700, %v699
    %v715 = vpack.c.b16 %v702, %v701
    %v716 = vpack.c.b16 %v704, %v703
    %v717 = vpack.c.b16 %v706, %v705
    %v718 = vpack.c.b16 %v708, %v707
    %v719 = vpack.c.b16 %v710, %v709
    %v720 = vpack.c.b16 %v712, %v711
    %729 = vmatprep.subr.bf16.mxu0 0
    %730 = vmatpush1.bf16.msra.mxu0 %v713
    %731 = vmatprep.subr.bf16.mxu0 0
    %732 = vmatpush1.bf16.msra.mxu0 %v714
    %733 = vmatprep.subr.bf16.mxu0 0
    %734 = vmatpush1.bf16.msra.mxu0 %v715
    %735 = vmatprep.subr.bf16.mxu0 0
    %736 = vmatpush1.bf16.msra.mxu0 %v716
    %737 = vmatprep.subr.bf16.mxu0 0
    %738 = vmatpush1.bf16.msra.mxu0 %v717
    %739 = vmatprep.subr.bf16.mxu0 0
    %740 = vmatpush1.bf16.msra.mxu0 %v718
    %741 = vmatprep.subr.bf16.mxu0 0
    %742 = vmatpush1.bf16.msra.mxu0 %v719
    %743 = vmatprep.subr.bf16.mxu0 0
    %744 = vmatpush1.bf16.msra.mxu0 %v720
    %745 = vmatprep.subr.bf16.mxu0 0
    %746 = vmatpush1.bf16.msra.mxu0 0
    %747 = vmatprep.subr.bf16.mxu0 0
    %748 = vmatpush1.bf16.msra.mxu0 0
    %749 = vmatprep.subr.bf16.mxu0 0
    %750 = vmatpush1.bf16.msra.mxu0 0
    %751 = vmatprep.subr.bf16.mxu0 0
    %752 = vmatpush1.bf16.msra.mxu0 0
    %753 = vmatprep.subr.bf16.mxu0 0
    %754 = vmatpush1.bf16.msra.mxu0 0
    %755 = vmatprep.subr.bf16.mxu0 0
    %756 = vmatpush1.bf16.msra.mxu0 0
    %757 = vmatprep.subr.bf16.mxu0 0
    %758 = vmatpush1.bf16.msra.mxu0 0
    %759 = vmatprep.subr.bf16.mxu0 0
    %760 = vmatpush1.bf16.msra.mxu0 0
    %761 = vmatprep.mubr.bf16.mxu0 0
    %762 = vmatmul.mubr.bf16.gmra.mrb[0].mxu0 %v664
    %v763 = vpop.f32.mrb[0].mxu0
    %v764 = vadd.f32 0.0, %v763
    %v765 = vpop.f32.mrb[0].mxu0
    %v766 = vpop.f32.mrb[0].mxu0
    %v767 = vpop.f32.mrb[0].mxu0
    %768 = vdwg.mxu0
    %v785 = vunpack.c.l.b16 %v648
    %v786 = vunpack.c.l.b16 %v649
    %v787 = vunpack.c.l.b16 %v650
    %v788 = vunpack.c.l.b16 %v651
    %v789 = vunpack.c.l.b16 %v652
    %v790 = vunpack.c.l.b16 %v653
    %v791 = vunpack.c.l.b16 %v654
    %v792 = vunpack.c.l.b16 %v655
    %v793 = vunpack.c.l.b16 %v656
    %v794 = vunpack.c.l.b16 %v657
    %v795 = vunpack.c.l.b16 %v658
    %v796 = vunpack.c.l.b16 %v659
    %v797 = vunpack.c.l.b16 %v660
    %v798 = vunpack.c.l.b16 %v661
    %v799 = vunpack.c.l.b16 %v662
    %v800 = vunpack.c.l.b16 %v663
    %v801 = vpack.c.b16 %v786, %v785
    %v802 = vpack.c.b16 %v788, %v787
    %v803 = vpack.c.b16 %v790, %v789
    %v804 = vpack.c.b16 %v792, %v791
    %v805 = vpack.c.b16 %v794, %v793
    %v806 = vpack.c.b16 %v796, %v795
    %v807 = vpack.c.b16 %v798, %v797
    %v808 = vpack.c.b16 %v800, %v799
    %817 = vmatprep.subr.bf16.mxu0 0
    %818 = vmatpush1.bf16.msra.mxu0 %v801
    %819 = vmatprep.subr.bf16.mxu0 0
    %820 = vmatpush1.bf16.msra.mxu0 %v802
    %821 = vmatprep.subr.bf16.mxu0 0
    %822 = vmatpush1.bf16.msra.mxu0 %v803
    %823 = vmatprep.subr.bf16.mxu0 0
    %824 = vmatpush1.bf16.msra.mxu0 %v804
    %825 = vmatprep.subr.bf16.mxu0 0
    %826 = vmatpush1.bf16.msra.mxu0 %v805
    %827 = vmatprep.subr.bf16.mxu0 0
    %828 = vmatpush1.bf16.msra.mxu0 %v806
    %829 = vmatprep.subr.bf16.mxu0 0
    %830 = vmatpush1.bf16.msra.mxu0 %v807
    %831 = vmatprep.subr.bf16.mxu0 0
    %832 = vmatpush1.bf16.msra.mxu0 %v808
    %833 = vmatprep.subr.bf16.mxu0 0
    %834 = vmatpush1.bf16.msra.mxu0 0
    %835 = vmatprep.subr.bf16.mxu0 0
    %836 = vmatpush1.bf16.msra.mxu0 0
    %837 = vmatprep.subr.bf16.mxu0 0
    %838 = vmatpush1.bf16.msra.mxu0 0
    %839 = vmatprep.subr.bf16.mxu0 0
    %840 = vmatpush1.bf16.msra.mxu0 0
    %841 = vmatprep.subr.bf16.mxu0 0
    %842 = vmatpush1.bf16.msra.mxu0 0
    %843 = vmatprep.subr.bf16.mxu0 0
    %844 = vmatpush1.bf16.msra.mxu0 0
    %845 = vmatprep.subr.bf16.mxu0 0
    %846 = vmatpush1.bf16.msra.mxu0 0
    %847 = vmatprep.subr.bf16.mxu0 0
    %848 = vmatpush1.bf16.msra.mxu0 0
    %849 = vmatprep.mubr.bf16.mxu0 0
    %850 = vmatmul.mubr.bf16.gmra.mrb[0].mxu0 %v647
    %v851 = vpop.f32.mrb[0].mxu0
    %v852 = vadd.f32 %v764, %v851
    %v853 = vpop.f32.mrb[0].mxu0
    %v854 = vpop.f32.mrb[0].mxu0
    %v855 = vpop.f32.mrb[0].mxu0
    %856 = vdwg.mxu0
    %v857 = vlaneseq
    %v858 = vshrl.u32 %v857, 7
    %v859 = vsub.s32 6, %v858
    %v860 = vrot.slane %v139, %v859
    %v861 = vadd.f32 %v852, %v860
    %v862 = vpack.c.bf16 %v861, %v861
    %863 = vmatprep.subr.bf16.mxu0 0
    %864 = vmatpush1.bf16.msra.mxu0 %v340
    %865 = vmatprep.subr.bf16.mxu0 0
    %866 = vmatpush1.bf16.msra.mxu0 %v341
    %867 = vmatprep.subr.bf16.mxu0 0
    %868 = vmatpush1.bf16.msra.mxu0 %v342
    %869 = vmatprep.subr.bf16.mxu0 0
    %870 = vmatpush1.bf16.msra.mxu0 %v343
    %871 = vmatprep.subr.bf16.mxu0 0
    %872 = vmatpush1.bf16.msra.mxu0 %v344
    %873 = vmatprep.subr.bf16.mxu0 0
    %874 = vmatpush1.bf16.msra.mxu0 %v345
    %875 = vmatprep.subr.bf16.mxu0 0
    %876 = vmatpush1.bf16.msra.mxu0 %v346
    %877 = vmatprep.subr.bf16.mxu0 0
    %878 = vmatpush1.bf16.msra.mxu0 %v347
    %879 = vmatprep.subr.bf16.mxu0 0
    %880 = vmatpush1.bf16.msra.mxu0 0
    %881 = vmatprep.subr.bf16.mxu0 0
    %882 = vmatpush1.bf16.msra.mxu0 0
    %883 = vmatprep.subr.bf16.mxu0 0
    %884 = vmatpush1.bf16.msra.mxu0 0
    %885 = vmatprep.subr.bf16.mxu0 0
    %886 = vmatpush1.bf16.msra.mxu0 0
    %887 = vmatprep.subr.bf16.mxu0 0
    %888 = vmatpush1.bf16.msra.mxu0 0
    %889 = vmatprep.subr.bf16.mxu0 0
    %890 = vmatpush1.bf16.msra.mxu0 0
    %891 = vmatprep.subr.bf16.mxu0 0
    %892 = vmatpush1.bf16.msra.mxu0 0
    %893 = vmatprep.subr.bf16.mxu0 0
    %894 = vmatpush1.bf16.msra.mxu0 0
    %895 = vmatprep.mubr.bf16.mxu0 0
    %896 = vmatmul.mubr.bf16.gmra.mrb[0].mxu0 %v862
    %v897 = vpop.f32.mrb[0].mxu0
    %v898 = vadd.f32 0.0, %v897
    %v899 = vpop.f32.mrb[0].mxu0
    %v900 = vpop.f32.mrb[0].mxu0
    %v901 = vpop.f32.mrb[0].mxu0
    %902 = vdwg.mxu0
    %v903 = vsub.f32 %v861, %v898
    %v904 = vmul.f32 %v903, %v903
    %v905 = vpack.c.bf16 %v904, %v904
    %906 = vmatprep.subr.bf16.mxu0 0
    %907 = vmatpush1.bf16.msra.mxu0 %v340
    %908 = vmatprep.subr.bf16.mxu0 0
    %909 = vmatpush1.bf16.msra.mxu0 %v341
    %910 = vmatprep.subr.bf16.mxu0 0
    %911 = vmatpush1.bf16.msra.mxu0 %v342
    %912 = vmatprep.subr.bf16.mxu0 0
    %913 = vmatpush1.bf16.msra.mxu0 %v343
    %914 = vmatprep.subr.bf16.mxu0 0
    %915 = vmatpush1.bf16.msra.mxu0 %v344
    %916 = vmatprep.subr.bf16.mxu0 0
    %917 = vmatpush1.bf16.msra.mxu0 %v345
    %918 = vmatprep.subr.bf16.mxu0 0
    %919 = vmatpush1.bf16.msra.mxu0 %v346
    %920 = vmatprep.subr.bf16.mxu0 0
    %921 = vmatpush1.bf16.msra.mxu0 %v347
    %922 = vmatprep.subr.bf16.mxu0 0
    %923 = vmatpush1.bf16.msra.mxu0 0
    %924 = vmatprep.subr.bf16.mxu0 0
    %925 = vmatpush1.bf16.msra.mxu0 0
    %926 = vmatprep.subr.bf16.mxu0 0
    %927 = vmatpush1.bf16.msra.mxu0 0
    %928 = vmatprep.subr.bf16.mxu0 0
    %929 = vmatpush1.bf16.msra.mxu0 0
    %930 = vmatprep.subr.bf16.mxu0 0
    %931 = vmatpush1.bf16.msra.mxu0 0
    %932 = vmatprep.subr.bf16.mxu0 0
    %933 = vmatpush1.bf16.msra.mxu0 0
    %934 = vmatprep.subr.bf16.mxu0 0
    %935 = vmatpush1.bf16.msra.mxu0 0
    %936 = vmatprep.subr.bf16.mxu0 0
    %937 = vmatpush1.bf16.msra.mxu0 0
    %938 = vmatprep.mubr.bf16.mxu0 0
    %939 = vmatmul.mubr.bf16.gmra.mrb[0].mxu0 %v905
    %v940 = vpop.f32.mrb[0].mxu0
    %v941 = vadd.f32 1e-05, %v940
    %v942 = vpop.f32.mrb[0].mxu0
    %v943 = vpop.f32.mrb[0].mxu0
    %v944 = vpop.f32.mrb[0].mxu0
    %945 = vdwg.mxu0
    %v946 = vrsqrt.pop %v941
    %v947 = vmul.f32 %v903, %v946
    %v948 = vlaneseq
    %v949 = vshrl.u32 %v948, 7
    %v950 = vsub.s32 7, %v949
    %v951 = vrot.slane %v139, %v950
    %v952 = vmul.f32 %v947, %v951
    %v953 = vlaneseq
    %v954 = vshrl.u32 %v953, 7
    %v955 = vsub.s32 0, %v954
    %v956 = vrot.slane %v140, %v955
    %v957 = vadd.f32 %v952, %v956
    %v958 = vmax.f32 %v957, 0.0
    %v959 = vpack.c.bf16 %v958, %v958
    %v960 = vld [vmem:[#allocation13] sm:$0xf]
    %v961 = vld [vmem:[#allocation13 + $0x4] sm:$0xf]
    %v962 = vld [vmem:[#allocation13 + $0x8] sm:$0xf]
    %v963 = vld [vmem:[#allocation13 + $0xc] sm:$0xf]
    %v964 = vld [vmem:[#allocation13 + $0x10] sm:$0xf]
    %v965 = vld [vmem:[#allocation13 + $0x14] sm:$0xf]
    %v966 = vld [vmem:[#allocation13 + $0x18] sm:$0xf]
    %v967 = vld [vmem:[#allocation13 + $0x1c] sm:$0xf]
    %v968 = vld [vmem:[#allocation13 + $0x20] sm:$0xf]
    %v969 = vld [vmem:[#allocation13 + $0x24] sm:$0xf]
    %v970 = vld [vmem:[#allocation13 + $0x28] sm:$0xf]
    %v971 = vld [vmem:[#allocation13 + $0x2c] sm:$0xf]
    %v972 = vld [vmem:[#allocation13 + $0x30] sm:$0xf]
    %v973 = vld [vmem:[#allocation13 + $0x34] sm:$0xf]
    %v974 = vld [vmem:[#allocation13 + $0x38] sm:$0xf]
    %v975 = vld [vmem:[#allocation13 + $0x3c] sm:$0xf]
    %v976 = vlaneseq
    %v977 = vshrl.u32 %v976, 7
    %v978 = vsub.s32 1, %v977
    %v979 = vrot.slane %v140, %v978
    %v996 = vunpack.c.l.b16 %v960
    %v997 = vunpack.c.l.b16 %v961
    %v998 = vunpack.c.l.b16 %v962
    %v999 = vunpack.c.l.b16 %v963
    %v1000 = vunpack.c.l.b16 %v964
    %v1001 = vunpack.c.l.b16 %v965
    %v1002 = vunpack.c.l.b16 %v966
    %v1003 = vunpack.c.l.b16 %v967
    %v1004 = vunpack.c.l.b16 %v968
    %v1005 = vunpack.c.l.b16 %v969
    %v1006 = vunpack.c.l.b16 %v970
    %v1007 = vunpack.c.l.b16 %v971
    %v1008 = vunpack.c.l.b16 %v972
    %v1009 = vunpack.c.l.b16 %v973
    %v1010 = vunpack.c.l.b16 %v974
    %v1011 = vunpack.c.l.b16 %v975
    %v1012 = vpack.c.b16 %v997, %v996
    %v1013 = vpack.c.b16 %v999, %v998
    %v1014 = vpack.c.b16 %v1001, %v1000
    %v1015 = vpack.c.b16 %v1003, %v1002
    %v1016 = vpack.c.b16 %v1005, %v1004
    %v1017 = vpack.c.b16 %v1007, %v1006
    %v1018 = vpack.c.b16 %v1009, %v1008
    %v1019 = vpack.c.b16 %v1011, %v1010
    %1028 = vmatprep.subr.bf16.mxu0 0
    %1029 = vmatpush1.bf16.msra.mxu0 %v1012
    %1030 = vmatprep.subr.bf16.mxu0 0
    %1031 = vmatpush1.bf16.msra.mxu0 %v1013
    %1032 = vmatprep.subr.bf16.mxu0 0
    %1033 = vmatpush1.bf16.msra.mxu0 %v1014
    %1034 = vmatprep.subr.bf16.mxu0 0
    %1035 = vmatpush1.bf16.msra.mxu0 %v1015
    %1036 = vmatprep.subr.bf16.mxu0 0
    %1037 = vmatpush1.bf16.msra.mxu0 %v1016
    %1038 = vmatprep.subr.bf16.mxu0 0
    %1039 = vmatpush1.bf16.msra.mxu0 %v1017
    %1040 = vmatprep.subr.bf16.mxu0 0
    %1041 = vmatpush1.bf16.msra.mxu0 %v1018
    %1042 = vmatprep.subr.bf16.mxu0 0
    %1043 = vmatpush1.bf16.msra.mxu0 %v1019
    %1044 = vmatprep.subr.bf16.mxu0 0
    %1045 = vmatpush1.bf16.msra.mxu0 0
    %1046 = vmatprep.subr.bf16.mxu0 0
    %1047 = vmatpush1.bf16.msra.mxu0 0
    %1048 = vmatprep.subr.bf16.mxu0 0
    %1049 = vmatpush1.bf16.msra.mxu0 0
    %1050 = vmatprep.subr.bf16.mxu0 0
    %1051 = vmatpush1.bf16.msra.mxu0 0
    %1052 = vmatprep.subr.bf16.mxu0 0
    %1053 = vmatpush1.bf16.msra.mxu0 0
    %1054 = vmatprep.subr.bf16.mxu0 0
    %1055 = vmatpush1.bf16.msra.mxu0 0
    %1056 = vmatprep.subr.bf16.mxu0 0
    %1057 = vmatpush1.bf16.msra.mxu0 0
    %1058 = vmatprep.subr.bf16.mxu0 0
    %1059 = vmatpush1.bf16.msra.mxu0 0
    %1060 = vmatprep.mubr.bf16.mxu0 0
    %1061 = vmatmul.mubr.bf16.gmra.mrb[0].mxu0 %v959
    %v1062 = vpop.f32.mrb[0].mxu0
    %v1063 = vadd.f32 %v979, %v1062
    %v1064 = vpop.f32.mrb[0].mxu0
    %v1065 = vpop.f32.mrb[0].mxu0
    %v1066 = vpop.f32.mrb[0].mxu0
    %1067 = vdwg.mxu0
    %1068 = vst [vmem:[#allocation16] sm:$0xf] %v1063
    // Predicated region
    $region70: #{tpu_custom_call.1} parent=1 // pred_check
      _
    $region71: #{tpu_custom_call.1} parent=1 // pred_check_branch
      %1070 = sbr.rel (0) target = $region73
    $region72: #{tpu_custom_call.1} parent=1 // pred_region
      %s1072 = ssub.s32 64, 64
      %1073 = vsyncadd [#allocation4], %s1072
      %s1075 = sshll.u32 [#allocation16], 4
      %s1076 = int_to_ptr.vmem [resolvable:$true] %s1075
      %1078 = dma.vmem_to_hbm [thread:$0]  %s1076, 64, %s9, [#allocation4]
    $region73: #{tpu_custom_call.1} parent=1 // pred_fallthru
      _
    // Predicated region
    $region74: #{tpu_custom_call.1} parent=1 // pred_check
      _
    $region75: #{tpu_custom_call.1} parent=1 // pred_check_branch
      %1080 = sbr.rel (0) target = $region77
    $region76: #{tpu_custom_call.1} parent=1 // pred_region
      %1081 = dma.done [#allocation4], 64
    $region77: #{tpu_custom_call.1} parent=1 // pred_fallthru
      _
    %1082 = vsyncpa [#allocation3], 1
    %1083 = vsyncpa [#allocation6], 1
    %1084 = vsyncpa [#allocation9], 1
    %1085 = vsyncpa [#allocation12], 1
    %1086 = vsyncpa [#allocation15], 1
    %1087 = vsyncpa [#allocation4], 1

</llo_original>
